<compile_context>
chip_gen: v7x
topology: tpu7x:2x2x1
jax: 0.10.0
libtpu: 0.0.40
codegen_flags: <defaults>
</compile_context>

<pallas_src>
import math

import jax
import jax.numpy as jnp
from jax import lax
from jax.experimental import pallas as pl
from jax.experimental.pallas import tpu as pltpu

LANES = 128          # lane tile (fast axis)
SUBLANES = 8         # f32 sublane tile
BLOCK_R_MAX = 4096   # rows per grid step (4096*128*4B = 2 MiB per f32 input buffer)
CHUNK_R_MAX = 64     # rows per in-kernel accumulation chunk (~8 f32 vregs live)


def _cdiv(a, b):
    return -(-a // b)


def _round_up(a, b):
    return _cdiv(a, b) * b


def _row_align(*dtypes):
    """Sublane alignment: 8 rows for 32-bit, 16 for 16-bit, 32 for 8-bit."""
    align = SUBLANES
    for dt in dtypes:
        pack = max(1, 4 // jnp.dtype(dt).itemsize)
        align = max(align, SUBLANES * pack)
    return align


def _choose_tiling(n, row_align, block_r_max):
    """Pick (block_r, num_blocks, rows_padded), rows_padded = block_r*num_blocks.

    Prefers zero padding (avoids the O(N) jnp.pad copy), keeps blocks large
    (<= block_r_max rows) and guarantees >= 2 grid blocks whenever there is
    enough data (>= 2 sublane tiles), so both v7x TensorCores get work.
    """
    rows_min = _cdiv(n, LANES)
    nb0 = max(_cdiv(rows_min, block_r_max),
              2 if rows_min >= 2 * row_align else 1)
    best = None
    for nb in range(nb0, nb0 + 9):
        block_r = _round_up(_cdiv(rows_min, nb), row_align)
        rows_padded = nb * block_r
        pad_rows = rows_padded - rows_min
        if best is None or pad_rows < best[0]:
            best = (pad_rows, nb, block_r, rows_padded)
        if pad_rows == 0 and n % LANES == 0:
            break
    _, num_blocks, block_r, rows_padded = best
    return block_r, num_blocks, rows_padded


def _make_partial_kernel(block_r, chunk):
    """Per-block partial-sum kernel: chunked accumulation into (8,128) vregs."""
    n_chunks = block_r // chunk
    reduce_chunk = chunk > SUBLANES

    def kernel(x_ref, t_ref, o_ref):
        def body(c, acc):
            start = pl.multiple_of(c * chunk, chunk)
            x = x_ref[pl.ds(start, chunk), :].astype(jnp.float32)
            t = t_ref[pl.ds(start, chunk), :].astype(jnp.float32)
            # -x*target + clamp(x, min=0) + log(1 + exp(-|x|))
            term = -x * t + jnp.maximum(x, 0.0) + jnp.log1p(jnp.exp(-jnp.abs(x)))
            if reduce_chunk:
                # chunk rows -> 8 rows via pure elementwise vreg adds (VPU);
                # the final cross-lane/sublane reduce happens outside the kernel.
                term = jnp.sum(term.reshape(-1, SUBLANES, LANES), axis=0)
            return acc + term

        acc = lax.fori_loop(0, n_chunks, body,
                            jnp.zeros((SUBLANES, LANES), jnp.float32),
                            unroll=min(4, n_chunks))
        o_ref[...] = acc

    return kernel


def sigmoid_cross_entropy_loss(x, target, *, block_r_max=BLOCK_R_MAX):
    """Pallas implementation of SigmoidCrossEntropyLoss.forward."""
    assert x.shape == target.shape
    n = x.size
    row_align = _row_align(x.dtype, target.dtype)
    block_r, num_blocks, rows_padded = _choose_tiling(n, row_align, block_r_max)

    xf = x.reshape(-1)
    tf = target.reshape(-1)
    pad = rows_padded * LANES - n
    if pad:
        # True zero padding: every padded element contributes exactly ln(2)
        # to the sum, which is subtracted analytically below.
        xf = jnp.pad(xf, (0, pad))
        tf = jnp.pad(tf, (0, pad))
    x2 = xf.reshape(rows_padded, LANES)
    t2 = tf.reshape(rows_padded, LANES)

    chunk = next(c for c in (CHUNK_R_MAX, 32, 16, 8) if block_r % c == 0)
    kernel = _make_partial_kernel(block_r, chunk)

    n_total = rows_padded * LANES
    cost = pl.CostEstimate(
        flops=8 * n_total,
        transcendentals=2 * n_total,             # exp + log1p per element
        bytes_accessed=(x2.size * x2.dtype.itemsize
                        + t2.size * t2.dtype.itemsize
                        + num_blocks * SUBLANES * LANES * 4),
    )

    partials = pl.pallas_call(
        kernel,
        out_shape=jax.ShapeDtypeStruct((num_blocks * SUBLANES, LANES),
                                       jnp.float32),
        grid_spec=pltpu.PrefetchScalarGridSpec(
            num_scalar_prefetch=0,
            grid=(num_blocks,),
            in_specs=[
                pl.BlockSpec((block_r, LANES), lambda i: (i, 0)),
                pl.BlockSpec((block_r, LANES), lambda i: (i, 0)),
            ],
            out_specs=pl.BlockSpec((SUBLANES, LANES), lambda i: (i, 0)),
        ),
        compiler_params=pltpu.CompilerParams(
            dimension_semantics=("parallel",)),
        cost_estimate=cost,
    )(x2, t2)

    total = jnp.sum(partials)
    if pad:
        # Zero-padded tail elements each contribute exactly log(1+exp(0)) = ln 2.
        total = total - jnp.float32(pad * math.log(2.0))
    return jnp.abs(total / jnp.float32(n))


def _reference(x, target):
    x = x.astype(jnp.float32)
    target = target.astype(jnp.float32)
    tmp = 1.0 + jnp.exp(-jnp.abs(x))
    return jnp.abs(
        jnp.mean(-x * target + jnp.maximum(x, 0.0) + jnp.log(tmp)))


if __name__ == "__main__":
    key = jax.random.PRNGKey(0)
    kx, kt = jax.random.split(key)

    # Small shapes consistent with a per-element logit/label loss.
    x = jax.random.normal(kx, (2, 4, 16, 16), dtype=jnp.float32)
    target = jax.random.bernoulli(kt, 0.5, (2, 4, 16, 16)).astype(jnp.float32)

    loss = sigmoid_cross_entropy_loss(x, target)
    jax.block_until_ready(loss)
    ref = _reference(x, target)
    assert jnp.allclose(loss, ref, atol=1e-5, rtol=1e-5), (loss, ref)

    # Unaligned size: exercises the minimal-padding path + analytic correction.
    xu = jax.random.normal(kx, (3, 5, 7, 11), dtype=jnp.float32)
    tu = jax.random.bernoulli(kt, 0.5, (3, 5, 7, 11)).astype(jnp.float32)
    loss_u = sigmoid_cross_entropy_loss(xu, tu)
    jax.block_until_ready(loss_u)
    ref_u = _reference(xu, tu)
    assert jnp.allclose(loss_u, ref_u, atol=1e-5, rtol=1e-4), (loss_u, ref_u)

    print("KERNEL_OK")
</pallas_src>

<mosaic_0001>
module attributes {stable_mosaic.version = 11 : i64} {
  func.func @kernel(%arg0: i32, %arg1: memref<8x128xf32, #tpu.memory_space<vmem>>, %arg2: memref<8x128xf32, #tpu.memory_space<vmem>>, %arg3: memref<8x128xf32, #tpu.memory_space<vmem>>) attributes {dimension_semantics = [#tpu.dimension_semantics<parallel>], iteration_bounds = array<i64: 2>, scalar_prefetch = 0 : i64, scratch_operands = 0 : i64, tpu.core_type = #tpu.core_type<tc>, window_params = [{transform_indices = @transform_0, window_bounds = array<i64: 8, 128>}, {transform_indices = @transform_1, window_bounds = array<i64: 8, 128>}, {transform_indices = @transform_2, window_bounds = array<i64: 8, 128>}]} {
    %cst = arith.constant 0.000000e+00 : f32
    %0 = vector.broadcast %cst : f32 to vector<8x128xf32>
    %c0_i32 = arith.constant 0 : i32
    %c8_i32 = arith.constant 8 : i32
    %1 = arith.muli %c0_i32, %c8_i32 : i32
    %2 = tpu.assume_multiple %1, 8 : i32
    %3 = arith.index_cast %2 : i32 to index
    %c0 = arith.constant 0 : index
    %4 = vector.load %arg1[%3, %c0] : memref<8x128xf32, #tpu.memory_space<vmem>>, vector<8x128xf32>
    %5 = arith.index_cast %2 : i32 to index
    %c0_0 = arith.constant 0 : index
    %6 = vector.load %arg2[%5, %c0_0] : memref<8x128xf32, #tpu.memory_space<vmem>>, vector<8x128xf32>
    %cst_1 = arith.constant 0.000000e+00 : f32
    %7 = vector.broadcast %cst_1 : f32 to vector<8x128xf32>
    %8 = arith.subf %7, %4 : vector<8x128xf32>
    %9 = arith.mulf %8, %6 : vector<8x128xf32>
    %cst_2 = arith.constant 0.000000e+00 : f32
    %10 = vector.broadcast %cst_2 : f32 to vector<8x128xf32>
    %11 = arith.maximumf %4, %10 : vector<8x128xf32>
    %12 = arith.addf %9, %11 : vector<8x128xf32>
    %13 = math.absf %4 : vector<8x128xf32>
    %cst_3 = arith.constant 0.000000e+00 : f32
    %14 = vector.broadcast %cst_3 : f32 to vector<8x128xf32>
    %15 = arith.subf %14, %13 : vector<8x128xf32>
    %16 = math.exp %15 : vector<8x128xf32>
    %17 = math.log1p %16 : vector<8x128xf32>
    %18 = arith.addf %12, %17 : vector<8x128xf32>
    %19 = arith.addf %0, %18 : vector<8x128xf32>
    %c1_i32 = arith.constant 1 : i32
    %c0_4 = arith.constant 0 : index
    %c0_5 = arith.constant 0 : index
    %20 = vector.load %arg3[%c0_4, %c0_5] : memref<8x128xf32, #tpu.memory_space<vmem>>, vector<8x128xf32>
    tpu.vector_store %arg3[%c0_4, %c0_5], %19 {strides = array<i32>} : memref<8x128xf32, #tpu.memory_space<vmem>>, vector<8x128xf32>,
    return
  }
  func.func @transform_0(%arg0: i32) -> (i32, i32) {
    %c0_i32 = arith.constant 0 : i32
    %c0_i32_0 = arith.constant 0 : i32
    return %arg0, %c0_i32 : i32, i32
  }
  func.func @transform_1(%arg0: i32) -> (i32, i32) {
    %c0_i32 = arith.constant 0 : i32
    %c0_i32_0 = arith.constant 0 : i32
    return %arg0, %c0_i32 : i32, i32
  }
  func.func @transform_2(%arg0: i32) -> (i32, i32) {
    %c0_i32 = arith.constant 0 : i32
    %c0_i32_0 = arith.constant 0 : i32
    return %arg0, %c0_i32 : i32, i32
  }
}

</mosaic_0001>

<llo_original>
// kernel: tpu_custom_call.1
$region0: #{tpu_custom_call.1}
  #allocation0 [shape = 'u32[]', space=smem, size = 0x4, offset = 0x4, fixed_abs, tag = 'smem constant byte address 0x4 - core index']
  #allocation1 [shape = 'u32[144,128]{1,0:T(1,128)}', space=vmem, size = 0x12000, scoped, tag = 'internal scratch']
  %s0 = inlined_call_operand.hbm [shape: f32[16,128], index: 0, kind: input, shape index: {}]
  %s1 = inlined_call_operand.hbm [shape: f32[16,128], index: 1, kind: input, shape index: {}]
  %s2 = inlined_call_operand.hbm [shape: f32[16,128], index: 2, kind: output, shape index: {}]
  %s3 = sld [smem:[#allocation0]]
  $region49: #{tpu_custom_call.1} parent=0
    _
  %s5 = ssub.s32 1, %s3
  %s6 = scalar_select 0, %s5, %s3
  $region1: #{tpu_custom_call.1} parent=0
    #allocation2 [shape = 'u8[8192]{0}', space=vmem, size = 0x2000, scoped, tag = 'input window, operand 0']
    #allocation3 [shape = 's32[2]{0}', space=sflag, size = 0x8, scoped, tag = 'scoped memory for tpu_custom_call.1']
    #allocation4 [shape = 's32[2]{0}', space=sflag, size = 0x8, scoped, tag = 'scoped memory for tpu_custom_call.1']
    #allocation5 [shape = 'u8[8192]{0}', space=vmem, size = 0x2000, scoped, tag = 'input window, operand 1']
    #allocation6 [shape = 's32[2]{0}', space=sflag, size = 0x8, scoped, tag = 'scoped memory for tpu_custom_call.1']
    #allocation7 [shape = 'u8[8192]{0}', space=vmem, size = 0x2000, scoped, tag = 'output window, operand 0']
    %7 = vsyncpa [#allocation3], 0
    %s8 = scalar_lea.sflag [#allocation3], 1
    %9 = vsyncpa %s8, 0
    %10 = vsyncpa [#allocation6], 0
    %s11 = scalar_lea.sflag [#allocation6], 1
    %12 = vsyncpa %s11, 0
    %13 = vsyncpa [#allocation4], 0
    %s14 = scalar_lea.sflag [#allocation4], 1
    %15 = vsyncpa %s14, 0
    loop: start=0, step=1, limit=4
    $region2: #{tpu_custom_call.1} parent=1 // loop_pre_header
      _
    $region3: #{tpu_custom_call.1} parent=1 // loop_header
      %s17 = sphi 0, %s21
      %p18 = scmp.ge.s32.totalorder %s17, 4
      %s27 = sphi 0, %s29
      %s30 = sphi 0, %s27
      %s31 = sphi 0, %s30
      %s47 = sphi 0, %s31
      %s53 = sphi 0, %s55
      %s56 = sphi 0, %s53
      %s57 = sphi 0, %s56
      %s73 = sphi 0, %s57
      %s79 = sphi 0, %s81
      %s82 = sphi 0, %s79
      %s83 = sphi 0, %s82
      %s99 = sphi 0, %s83
    $region4: #{tpu_custom_call.1} parent=1 // loop_header_branch
      %20 = sbr.rel (%p18) target = $region8
    $region5: #{tpu_custom_call.1} parent=1 // loop_body
      %s22 = ssub.s32 %s17, 1
      %s23 = ssub.s32 %s17, 2
      %s24 = sadd.s32 %s17, 1
      %s25 = ssub.s32 %s17, %s24
      %p26 = scmp.eq.s32.totalorder %s25, 0
      %s28 = sadd.s32 %s27, 1
      %s29 = scalar_select %p26, %s27, %s28
      %p32 = pneg %p26
      %p33 = scmp.eq.s32.totalorder %s17, 1
      %p34 = por %p32, %p33
      %p35 = scmp.ne.s32.totalorder %s27, %s30
      %p36 = scmp.eq.s32.totalorder %s17, 0
      %p37 = por %p35, %p36
      %p38 = scmp.ne.s32.totalorder %s27, %s30
      %p39 = scmp.eq.s32.totalorder %s22, 1
      %p40 = por %p38, %p39
      %p41 = scmp.ne.s32.totalorder %s30, %s31
      %p42 = scmp.eq.s32.totalorder %s22, 0
      %p43 = por %p41, %p42
      %p44 = scmp.ne.s32.totalorder %s30, %s31
      %p45 = scmp.eq.s32.totalorder %s23, 1
      %p46 = por %p44, %p45
      %p48 = scmp.ne.s32.totalorder %s31, %s47
      %p49 = scmp.eq.s32.totalorder %s23, 0
      %p50 = por %p48, %p49
      %s51 = ssub.s32 %s17, %s24
      %p52 = scmp.eq.s32.totalorder %s51, 0
      %s54 = sadd.s32 %s53, 1
      %s55 = scalar_select %p52, %s53, %s54
      %p58 = pneg %p52
      %p59 = scmp.eq.s32.totalorder %s17, 1
      %p60 = por %p58, %p59
      %p61 = scmp.ne.s32.totalorder %s53, %s56
      %p62 = scmp.eq.s32.totalorder %s17, 0
      %p63 = por %p61, %p62
      %p64 = scmp.ne.s32.totalorder %s53, %s56
      %p65 = scmp.eq.s32.totalorder %s22, 1
      %p66 = por %p64, %p65
      %p67 = scmp.ne.s32.totalorder %s56, %s57
      %p68 = scmp.eq.s32.totalorder %s22, 0
      %p69 = por %p67, %p68
      %p70 = scmp.ne.s32.totalorder %s56, %s57
      %p71 = scmp.eq.s32.totalorder %s23, 1
      %p72 = por %p70, %p71
      %p74 = scmp.ne.s32.totalorder %s57, %s73
      %p75 = scmp.eq.s32.totalorder %s23, 0
      %p76 = por %p74, %p75
      %s77 = ssub.s32 %s17, %s24
      %p78 = scmp.eq.s32.totalorder %s77, 0
      %s80 = sadd.s32 %s79, 1
      %s81 = scalar_select %p78, %s79, %s80
      %p84 = pneg %p78
      %p85 = scmp.eq.s32.totalorder %s17, 1
      %p86 = por %p84, %p85
      %p87 = scmp.ne.s32.totalorder %s79, %s82
      %p88 = scmp.eq.s32.totalorder %s17, 0
      %p89 = por %p87, %p88
      %p90 = scmp.ne.s32.totalorder %s79, %s82
      %p91 = scmp.eq.s32.totalorder %s22, 1
      %p92 = por %p90, %p91
      %p93 = scmp.ne.s32.totalorder %s82, %s83
      %p94 = scmp.eq.s32.totalorder %s22, 0
      %p95 = por %p93, %p94
      %p96 = scmp.ne.s32.totalorder %s82, %s83
      %p97 = scmp.eq.s32.totalorder %s23, 1
      %p98 = por %p96, %p97
      %p100 = scmp.ne.s32.totalorder %s83, %s99
      %p101 = scmp.eq.s32.totalorder %s23, 0
      %p102 = por %p100, %p101
      %p103 = scmp.le.s32.totalorder 1, %s17
      %p104 = scmp.lt.s32.totalorder %s17, 3
      %p105 = pnand %p103, %p104
      %p106 = pneg %p105
      // Predicated region
      $region9: #{tpu_custom_call.1} parent=5 // pred_check
        _
      $region10: #{tpu_custom_call.1} parent=5 // pred_check_branch
        %108 = sbr.rel (%p105) target = $region12
      $region11: #{tpu_custom_call.1} parent=5 // pred_region
        %s109 = ssub.s32 %s17, 1
      $region12: #{tpu_custom_call.1} parent=5 // pred_fallthru
        _
      %p110 = scmp.lt.s32.totalorder %s17, 2
      // Predicated region
      $region13: #{tpu_custom_call.1} parent=5 // pred_check
        %p111 = pneg %p110
      $region14: #{tpu_custom_call.1} parent=5 // pred_check_branch
        %113 = sbr.rel (%p111) target = $region16
      $region15: #{tpu_custom_call.1} parent=5 // pred_region
        // Predicated region
        $region17: #{tpu_custom_call.1} parent=15 // pred_check
          %p114 = pneg %p37
        $region18: #{tpu_custom_call.1} parent=15 // pred_check_branch
          %116 = sbr.rel (%p114) target = $region20
        $region19: #{tpu_custom_call.1} parent=15 // pred_region
          %s117 = sand.u32 %s27, 1
          %s118 = scalar_lea.sflag [#allocation3], %s117
          %s119 = sand.u32 %s27, 1
          %s120 = smul.addr %s119, 8
          %s121 = scalar_lea.vmem [#allocation2], %s120
          %s123 = ssub.s32 128, 128
          %124 = vsyncadd %s118, %s123
          %s125 = smul.addr %s17, 128
          %s126 = scalar_lea.hbm %s0, %s125
          %s128 = sshll.u32 %s121, 4
          %s129 = int_to_ptr.vmem [resolvable:$true] %s128
          %131 = dma.hbm_to_vmem [thread:$0]  %s126, 128, %s129, %s118
        $region20: #{tpu_custom_call.1} parent=15 // pred_fallthru
          _
        // Predicated region
        $region21: #{tpu_custom_call.1} parent=15 // pred_check
          %p132 = pneg %p63
        $region22: #{tpu_custom_call.1} parent=15 // pred_check_branch
          %134 = sbr.rel (%p132) target = $region24
        $region23: #{tpu_custom_call.1} parent=15 // pred_region
          %s135 = sand.u32 %s53, 1
          %s136 = scalar_lea.sflag [#allocation6], %s135
          %s137 = sand.u32 %s53, 1
          %s138 = smul.addr %s137, 8
          %s139 = scalar_lea.vmem [#allocation5], %s138
          %s141 = ssub.s32 128, 128
          %142 = vsyncadd %s136, %s141
          %s143 = smul.addr %s17, 128
          %s144 = scalar_lea.hbm %s1, %s143
          %s146 = sshll.u32 %s139, 4
          %s147 = int_to_ptr.vmem [resolvable:$true] %s146
          %149 = dma.hbm_to_vmem [thread:$0]  %s144, 128, %s147, %s136
        $region24: #{tpu_custom_call.1} parent=15 // pred_fallthru
          _
      $region16: #{tpu_custom_call.1} parent=5 // pred_fallthru
        _
      %p150 = scmp.le.s32.totalorder 1, %s17
      %p151 = scmp.lt.s32.totalorder %s17, 3
      %p152 = pnand %p150, %p151
      %p153 = pneg %p152
      // Predicated region
      $region25: #{tpu_custom_call.1} parent=5 // pred_check
        _
      $region26: #{tpu_custom_call.1} parent=5 // pred_check_branch
        %155 = sbr.rel (%p152) target = $region28
      $region27: #{tpu_custom_call.1} parent=5 // pred_region
        %s156 = ssub.s32 %s17, 1
        %s157 = sand.u32 %s30, 1
        %s158 = scalar_lea.sflag [#allocation3], %s157
        %s159 = sand.u32 %s30, 1
        %s160 = smul.addr %s159, 8
        %s161 = scalar_lea.vmem [#allocation2], %s160
        // Predicated region
        $region29: #{tpu_custom_call.1} parent=27 // pred_check
          %p162 = pneg %p43
        $region30: #{tpu_custom_call.1} parent=27 // pred_check_branch
          %164 = sbr.rel (%p162) target = $region32
        $region31: #{tpu_custom_call.1} parent=27 // pred_region
          %165 = dma.done %s158, 128
        $region32: #{tpu_custom_call.1} parent=27 // pred_fallthru
          _
        %s166 = sand.u32 %s56, 1
        %s167 = scalar_lea.sflag [#allocation6], %s166
        %s168 = sand.u32 %s56, 1
        %s169 = smul.addr %s168, 8
        %s170 = scalar_lea.vmem [#allocation5], %s169
        // Predicated region
        $region33: #{tpu_custom_call.1} parent=27 // pred_check
          %p171 = pneg %p69
        $region34: #{tpu_custom_call.1} parent=27 // pred_check_branch
          %173 = sbr.rel (%p171) target = $region36
        $region35: #{tpu_custom_call.1} parent=27 // pred_region
          %174 = dma.done %s167, 128
        $region36: #{tpu_custom_call.1} parent=27 // pred_fallthru
          _
        %s175 = sand.u32 %s30, 1
        %s176 = scalar_lea.sflag [#allocation3], %s175
        %s177 = sand.u32 %s30, 1
        %s178 = smul.addr %s177, 8
        %s179 = scalar_lea.vmem [#allocation2], %s178
        %p180 = pneg %p43
        %p181 = pneg %p40
        %s182 = sand.u32 %s56, 1
        %s183 = scalar_lea.sflag [#allocation6], %s182
        %s184 = sand.u32 %s56, 1
        %s185 = smul.addr %s184, 8
        %s186 = scalar_lea.vmem [#allocation5], %s185
        %p187 = pneg %p69
        %p188 = pneg %p66
        %p189 = pneg %p95
        %p190 = pneg %p92
        %s191 = sand.u32 %s82, 1
        %s192 = scalar_lea.sflag [#allocation4], %s191
        %s193 = sand.u32 %s82, 1
        %s194 = smul.addr %s193, 8
        %s195 = scalar_lea.vmem [#allocation7], %s194
        %v196 = vld [vmem:[%s161] sm:$0xff]
        %v197 = vld [vmem:[%s170] sm:$0xff]
        %v198 = vsub.f32 0.0, %v196
        %v199 = vmul.f32 %v198, %v197
        %v200 = vmax.f32 %v196, 0.0
        %v201 = vadd.f32 %v199, %v200
        %v202 = vand.u32 2147483647, %v196
        %v203 = vsub.f32 0.0, %v202
        %v204 = vmul.f32 %v203, 1.442695
        %v205 = vpow.pop %v204
        %v206 = vadd.f32 %v205, 1.0
        %v207 = vlog2.pop %v206
        %v208 = vmul.f32 %v207, 0.6931472
        %v209 = vmul.f32 -0.5, %v205
        %v210 = vadd.f32 %v209, 1.0
        %v211 = vmul.f32 %v210, %v205
        %v212 = vand.u32 2147483647, %v205
        %vm213 = vcmp.lt.f32.partialorder %v212, 0.0004427343
        %v214 = vsel %vm213, %v211, %v208
        %v215 = vadd.f32 %v201, %v214
        %v216 = vadd.f32 %v215, 0.0
        %217 = vst [vmem:[%s195] sm:$0xff] %v216
        %s218 = sand.u32 %s82, 1
        %s219 = scalar_lea.sflag [#allocation4], %s218
        %s220 = sand.u32 %s82, 1
        %s221 = smul.addr %s220, 8
        %s222 = scalar_lea.vmem [#allocation7], %s221
        // Predicated region
        $region37: #{tpu_custom_call.1} parent=27 // pred_check
          %p223 = pneg %p92
        $region38: #{tpu_custom_call.1} parent=27 // pred_check_branch
          %225 = sbr.rel (%p223) target = $region40
        $region39: #{tpu_custom_call.1} parent=27 // pred_region
          %s227 = ssub.s32 128, 128
          %228 = vsyncadd %s219, %s227
          %s229 = smul.addr %s22, 128
          %s230 = scalar_lea.hbm %s2, %s229
          %s232 = sshll.u32 %s222, 4
          %s233 = int_to_ptr.vmem [resolvable:$true] %s232
          %235 = dma.vmem_to_hbm [thread:$0]  %s233, 128, %s230, %s219
        $region40: #{tpu_custom_call.1} parent=27 // pred_fallthru
          _
      $region28: #{tpu_custom_call.1} parent=5 // pred_fallthru
        _
      %p236 = scmp.le.s32.totalorder 2, %s17
      // Predicated region
      $region41: #{tpu_custom_call.1} parent=5 // pred_check
        %p237 = pneg %p236
      $region42: #{tpu_custom_call.1} parent=5 // pred_check_branch
        %239 = sbr.rel (%p237) target = $region44
      $region43: #{tpu_custom_call.1} parent=5 // pred_region
        %s240 = ssub.s32 %s17, 2
        // Predicated region
        $region45: #{tpu_custom_call.1} parent=43 // pred_check
          %p241 = pneg %p98
        $region46: #{tpu_custom_call.1} parent=43 // pred_check_branch
          %243 = sbr.rel (%p241) target = $region48
        $region47: #{tpu_custom_call.1} parent=43 // pred_region
          %s244 = sand.u32 %s83, 1
          %s245 = scalar_lea.sflag [#allocation4], %s244
          %s246 = sand.u32 %s83, 1
          %s247 = smul.addr %s246, 8
          %s248 = scalar_lea.vmem [#allocation7], %s247
          %249 = dma.done %s245, 128
        $region48: #{tpu_custom_call.1} parent=43 // pred_fallthru
          _
      $region44: #{tpu_custom_call.1} parent=5 // pred_fallthru
        _
    $region6: #{tpu_custom_call.1} parent=1 // loop_footer
      %s21 = sadd.s32 1, %s17
    $region7: #{tpu_custom_call.1} parent=1 // loop_footer_branch
      %16 = sbr.rel target = $region3
    $region8: #{tpu_custom_call.1} parent=1 // loop_exit
      _
    %250 = vsyncpa [#allocation3], 1
    %s251 = scalar_lea.sflag [#allocation3], 1
    %252 = vsyncpa %s251, 1
    %253 = vsyncpa [#allocation6], 1
    %s254 = scalar_lea.sflag [#allocation6], 1
    %255 = vsyncpa %s254, 1
    %256 = vsyncpa [#allocation4], 1
    %s257 = scalar_lea.sflag [#allocation4], 1
    %258 = vsyncpa %s257, 1

</llo_original>
